<compile_context>
chip_gen: v6e
topology: v6e:2x2x1
jax: 0.10.0
libtpu: 0.0.40
codegen_flags: <defaults>
</compile_context>

<pallas_src>
import functools

import jax
import jax.numpy as jnp
from jax.experimental import pallas as pl
from jax.experimental.pallas import tpu as pltpu


def _round_up(x, m):
    return ((x + m - 1) // m) * m


def _resblock_kernel(num_layers, x_ref, *refs):
    """refs = (w_0, b_0, w_1, b_1, ..., o_ref).

    x_ref : (1, C, T)  input tile, spatial on the 128-lane axis
    w_i   : (C, C)     conv weight (out, in) for the 1x1 conv (pre-cast f32)
    b_i   : (C, 1)     conv bias (pre-shaped for lane broadcast)
    o_ref : (1, C, T)  output tile
    """
    o_ref = refs[-1]
    param_refs = refs[:-1]

    x = x_ref[0]                                   # (C, T) float32
    h = x
    for i in range(num_layers):
        w = param_refs[2 * i][...]                 # (C_out, C_in)
        b = param_refs[2 * i + 1][...]             # (C_out, 1)
        # 1x1 conv in (C, HW) layout: no operand transpose, no per-step casts.
        h = jnp.dot(w, h, preferred_element_type=jnp.float32) + b
    o_ref[0] = (h + x).astype(o_ref.dtype)         # residual add


def resblock_pallas(x_nchw, weights, biases, *, max_tile_hw=2048):
    """ResBlock forward.

    x_nchw  : (N, C, H, W) float32
    weights : list of (C, C) arrays (PyTorch conv weight squeezed from (C, C, 1, 1))
    biases  : list of (C,) arrays
    returns : (N, C, H, W) float32
    """
    num_layers = len(weights)
    N, C, H, W = x_nchw.shape
    for w in weights:
        assert w.shape == (C, C), "residual add requires in_channels == out_channels"

    HW = H * W
    # Spatial axis goes on lanes: tile in multiples of 128, pad ragged tails.
    tile_hw = min(_round_up(max_tile_hw, 128), _round_up(HW, 128))
    HW_pad = _round_up(HW, tile_hw)

    x3 = x_nchw.reshape(N, C, HW)                  # contiguous reshape, no transpose
    if HW_pad != HW:
        x3 = jnp.pad(x3, ((0, 0), (0, 0), (0, HW_pad - HW)))

    # Pre-cast / pre-shape parameters once (hoisted out of the grid loop).
    params = []
    for w, b in zip(weights, biases):
        params.append(w.astype(jnp.float32))                 # (C_out, C_in)
        params.append(b.reshape(C, 1).astype(jnp.float32))   # (C_out, 1)

    param_specs = []
    for _ in range(num_layers):
        param_specs.append(pl.BlockSpec((C, C), lambda n, s: (0, 0)))
        param_specs.append(pl.BlockSpec((C, 1), lambda n, s: (0, 0)))

    kernel = functools.partial(_resblock_kernel, num_layers)

    # Explicit VMEM budget: double-buffered in/out tiles + resident params
    # (+ slack), kept well under v7x's 64 MiB physical VMEM.
    tile_bytes = C * tile_hw * 4
    param_bytes = sum(int(p.size) * 4 for p in params)
    vmem_limit = min(max(4 * tile_bytes + 4 * param_bytes + (4 << 20), 8 << 20),
                     32 << 20)

    # TODO(synk): bf16 activation I/O (load bf16 / accumulate f32 / store bf16)
    # would halve HBM traffic on this memory-bound kernel; kept f32 to match
    # the PyTorch reference numerics exactly.
    out3 = pl.pallas_call(
        kernel,
        out_shape=jax.ShapeDtypeStruct((N, C, HW_pad), x3.dtype),
        grid_spec=pltpu.PrefetchScalarGridSpec(
            num_scalar_prefetch=0,
            grid=(N, HW_pad // tile_hw),
            in_specs=[pl.BlockSpec((1, C, tile_hw), lambda n, s: (n, 0, s))]
                     + param_specs,
            out_specs=pl.BlockSpec((1, C, tile_hw), lambda n, s: (n, 0, s)),
        ),
        compiler_params=pltpu.CompilerParams(
            dimension_semantics=("parallel", "parallel"),
            vmem_limit_bytes=vmem_limit),
    )(x3, *params)

    if HW_pad != HW:
        out3 = out3[:, :, :HW]
    return out3.reshape(N, C, H, W)


def resblock_reference(x_nchw, weights, biases):
    """Pure-JAX reference matching the PyTorch forward exactly."""
    orig = x_nchw
    x = x_nchw
    for w, b in zip(weights, biases):
        # 1x1 conv: einsum over channel dim, NCHW layout.
        x = jnp.einsum("oc,nchw->nohw", w, x) + b[None, :, None, None]
    return x + orig


if __name__ == "__main__":
    # ResBlock(in_channels=4, out_channels=4, num_layers=2)
    # (residual add requires in_channels == out_channels)
    N, C, H, W = 2, 4, 16, 16
    num_layers = 2

    key = jax.random.PRNGKey(0)
    kx, *kps = jax.random.split(key, 1 + 2 * num_layers)

    x = jax.random.normal(kx, (N, C, H, W), dtype=jnp.float32)

    weights, biases = [], []
    for i in range(num_layers):
        # PyTorch Conv2d weight shape (out, in, 1, 1) -> squeeze to (out, in).
        w = 0.1 * jax.random.normal(kps[2 * i], (C, C), dtype=jnp.float32)
        b = 0.1 * jax.random.normal(kps[2 * i + 1], (C,), dtype=jnp.float32)
        weights.append(w)
        biases.append(b)

    out = resblock_pallas(x, weights, biases)
    out = jax.block_until_ready(out)

    ref = resblock_reference(x, weights, biases)
    assert out.shape == (N, C, H, W)
    assert jnp.allclose(out, ref, atol=1e-5, rtol=1e-5), "mismatch vs reference"

    print("KERNEL_OK")
</pallas_src>

<mosaic_0001>
module attributes {stable_mosaic.version = 11 : i64} {
  func.func @_resblock_kernel(%arg0: i32, %arg1: i32, %arg2: memref<1x4x256xf32, #tpu.memory_space<vmem>>, %arg3: memref<4x4xf32, #tpu.memory_space<vmem>>, %arg4: memref<4x1xf32, #tpu.memory_space<vmem>>, %arg5: memref<4x4xf32, #tpu.memory_space<vmem>>, %arg6: memref<4x1xf32, #tpu.memory_space<vmem>>, %arg7: memref<1x4x256xf32, #tpu.memory_space<vmem>>) attributes {dimension_semantics = [#tpu.dimension_semantics<parallel>, #tpu.dimension_semantics<parallel>], iteration_bounds = array<i64: 2, 1>, scalar_prefetch = 0 : i64, scratch_operands = 0 : i64, tpu.core_type = #tpu.core_type<tc>, window_params = [{transform_indices = @transform_0, window_bounds = array<i64: 1, 4, 256>}, {pipeline_mode = #tpu.pipeline_mode<synchronous>, transform_indices = @transform_1, window_bounds = array<i64: 4, 4>}, {pipeline_mode = #tpu.pipeline_mode<synchronous>, transform_indices = @transform_2, window_bounds = array<i64: 4, 1>}, {pipeline_mode = #tpu.pipeline_mode<synchronous>, transform_indices = @transform_3, window_bounds = array<i64: 4, 4>}, {pipeline_mode = #tpu.pipeline_mode<synchronous>, transform_indices = @transform_4, window_bounds = array<i64: 4, 1>}, {transform_indices = @transform_5, window_bounds = array<i64: 1, 4, 256>}]} {
    %c0 = arith.constant 0 : index
    %c0_0 = arith.constant 0 : index
    %c0_1 = arith.constant 0 : index
    %0 = vector.load %arg2[%c0, %c0_0, %c0_1] : memref<1x4x256xf32, #tpu.memory_space<vmem>>, vector<1x4x256xf32>
    %1 = vector.shape_cast %0 : vector<1x4x256xf32> to vector<4x256xf32>
    %c0_2 = arith.constant 0 : index
    %c0_3 = arith.constant 0 : index
    %2 = vector.load %arg3[%c0_2, %c0_3] : memref<4x4xf32, #tpu.memory_space<vmem>>, vector<4x4xf32>
    %c0_4 = arith.constant 0 : index
    %c0_5 = arith.constant 0 : index
    %3 = vector.load %arg4[%c0_4, %c0_5] : memref<4x1xf32, #tpu.memory_space<vmem>>, vector<4x1xf32>
    %cst = arith.constant dense<0.000000e+00> : vector<4x256xf32>
    %4 = tpu.matmul %2, %1, %cst {dimension_numbers = #tpu.dot_dimension_numbers<[1], [0], [0], [1], [0, 0, 1, 1], [], []>} : vector<4x4xf32>, vector<4x256xf32>, vector<4x256xf32> -> vector<4x256xf32>
    %5 = vector.broadcast %3 : vector<4x1xf32> to vector<4x256xf32>
    %6 = arith.addf %4, %5 : vector<4x256xf32>
    %c0_6 = arith.constant 0 : index
    %c0_7 = arith.constant 0 : index
    %7 = vector.load %arg5[%c0_6, %c0_7] : memref<4x4xf32, #tpu.memory_space<vmem>>, vector<4x4xf32>
    %c0_8 = arith.constant 0 : index
    %c0_9 = arith.constant 0 : index
    %8 = vector.load %arg6[%c0_8, %c0_9] : memref<4x1xf32, #tpu.memory_space<vmem>>, vector<4x1xf32>
    %cst_10 = arith.constant dense<0.000000e+00> : vector<4x256xf32>
    %9 = tpu.matmul %7, %6, %cst_10 {dimension_numbers = #tpu.dot_dimension_numbers<[1], [0], [0], [1], [0, 0, 1, 1], [], []>} : vector<4x4xf32>, vector<4x256xf32>, vector<4x256xf32> -> vector<4x256xf32>
    %10 = vector.broadcast %8 : vector<4x1xf32> to vector<4x256xf32>
    %11 = arith.addf %9, %10 : vector<4x256xf32>
    %12 = arith.addf %11, %1 : vector<4x256xf32>
    %c0_11 = arith.constant 0 : index
    %c0_12 = arith.constant 0 : index
    %c0_13 = arith.constant 0 : index
    %13 = vector.load %arg7[%c0_11, %c0_12, %c0_13] : memref<1x4x256xf32, #tpu.memory_space<vmem>>, vector<1x4x256xf32>
    %14 = vector.shape_cast %13 : vector<1x4x256xf32> to vector<4x256xf32>
    %15 = vector.shape_cast %12 : vector<4x256xf32> to vector<1x4x256xf32>
    tpu.vector_store %arg7[%c0_11, %c0_12, %c0_13], %15 {strides = array<i32>} : memref<1x4x256xf32, #tpu.memory_space<vmem>>, vector<1x4x256xf32>,
    return
  }
  func.func @transform_0(%arg0: i32, %arg1: i32) -> (i32, i32, i32) {
    %c0_i32 = arith.constant 0 : i32
    %c0_i32_0 = arith.constant 0 : i32
    return %arg0, %c0_i32, %arg1 : i32, i32, i32
  }
  func.func @transform_1(%arg0: i32, %arg1: i32) -> (i32, i32) {
    %c0_i32 = arith.constant 0 : i32
    %c0_i32_0 = arith.constant 0 : i32
    %c0_i32_1 = arith.constant 0 : i32
    return %c0_i32, %c0_i32_0 : i32, i32
  }
  func.func @transform_2(%arg0: i32, %arg1: i32) -> (i32, i32) {
    %c0_i32 = arith.constant 0 : i32
    %c0_i32_0 = arith.constant 0 : i32
    %c0_i32_1 = arith.constant 0 : i32
    return %c0_i32, %c0_i32_0 : i32, i32
  }
  func.func @transform_3(%arg0: i32, %arg1: i32) -> (i32, i32) {
    %c0_i32 = arith.constant 0 : i32
    %c0_i32_0 = arith.constant 0 : i32
    %c0_i32_1 = arith.constant 0 : i32
    return %c0_i32, %c0_i32_0 : i32, i32
  }
  func.func @transform_4(%arg0: i32, %arg1: i32) -> (i32, i32) {
    %c0_i32 = arith.constant 0 : i32
    %c0_i32_0 = arith.constant 0 : i32
    %c0_i32_1 = arith.constant 0 : i32
    return %c0_i32, %c0_i32_0 : i32, i32
  }
  func.func @transform_5(%arg0: i32, %arg1: i32) -> (i32, i32, i32) {
    %c0_i32 = arith.constant 0 : i32
    %c0_i32_0 = arith.constant 0 : i32
    return %arg0, %c0_i32, %arg1 : i32, i32, i32
  }
}

</mosaic_0001>

<llo_original>
// kernel: tpu_custom_call.1
$region0: #{tpu_custom_call.1}
  #allocation0 [shape = 'u32[]', space=smem, size = 0x4, offset = 0x4, fixed_abs, tag = 'smem constant byte address 0x4 - core index']
  #allocation1 [shape = 'u32[144,128]{1,0:T(1,128)}', space=vmem, size = 0x12000, scoped, tag = 'internal scratch']
  %s0 = inlined_call_operand.hbm [shape: f32[2,4,256], index: 0, kind: input, shape index: {}]
  %s1 = inlined_call_operand.vmem [shape: f32[4,4], index: 1, kind: input, shape index: {}]
  %s2 = inlined_call_operand.vmem [shape: f32[4,1], index: 2, kind: input, shape index: {}]
  %s3 = inlined_call_operand.vmem [shape: f32[4,4], index: 3, kind: input, shape index: {}]
  %s4 = inlined_call_operand.vmem [shape: f32[4,1], index: 4, kind: input, shape index: {}]
  %s5 = inlined_call_operand.hbm [shape: f32[2,4,256], index: 5, kind: output, shape index: {}]
  %s6 = sld [smem:[#allocation0]]
  $region57: #{tpu_custom_call.1} parent=0
    _
  %s8 = ssub.s32 1, %s6
  %s9 = scalar_select 0, %s8, %s6
  $region1: #{tpu_custom_call.1} parent=0
    #allocation2 [shape = 'u8[8192]{0}', space=vmem, size = 0x2000, scoped, tag = 'input window, operand 0']
    #allocation3 [shape = 's32[2]{0}', space=sflag, size = 0x8, scoped, tag = 'scoped memory for tpu_custom_call.1']
    #allocation4 [shape = 's32[2]{0}', space=sflag, size = 0x8, scoped, tag = 'scoped memory for tpu_custom_call.1']
    #allocation5 [shape = 'u8[8192]{0}', space=vmem, size = 0x2000, scoped, tag = 'output window, operand 0']
    %10 = vsyncpa [#allocation3], 0
    %s11 = scalar_lea.sflag [#allocation3], 1
    %12 = vsyncpa %s11, 0
    %13 = vsyncpa [#allocation4], 0
    %s14 = scalar_lea.sflag [#allocation4], 1
    %15 = vsyncpa %s14, 0
    loop: start=0, step=1, limit=4
    $region2: #{tpu_custom_call.1} parent=1 // loop_pre_header
      _
    $region3: #{tpu_custom_call.1} parent=1 // loop_header
      %s17 = sphi 0, %s21
      %p18 = scmp.ge.s32.totalorder %s17, 4
      %s24 = sphi 0, %s36
      %s25 = sphi 0, %s32
      %s26 = sphi 0, %s24
      %s27 = sphi 0, %s25
      %s28 = sphi 0, %s26
      %s29 = sphi 0, %s27
      %s41 = sphi 0, %s43
      %s44 = sphi 0, %s41
      %s45 = sphi 0, %s44
      %s61 = sphi 0, %s45
      %s65 = sphi 0, %s65
      %s67 = sphi 0, %s65
      %s68 = sphi 0, %s67
      %s82 = sphi 0, %s68
      %s86 = sphi 0, %s86
      %s88 = sphi 0, %s86
      %s89 = sphi 0, %s88
      %s103 = sphi 0, %s89
      %s107 = sphi 0, %s107
      %s109 = sphi 0, %s107
      %s110 = sphi 0, %s109
      %s124 = sphi 0, %s110
      %s128 = sphi 0, %s128
      %s130 = sphi 0, %s128
      %s131 = sphi 0, %s130
      %s145 = sphi 0, %s131
      %s153 = sphi 0, %s155
      %s156 = sphi 0, %s153
      %s157 = sphi 0, %s156
      %s173 = sphi 0, %s157
    $region4: #{tpu_custom_call.1} parent=1 // loop_header_branch
      %20 = sbr.rel (%p18) target = $region8
    $region5: #{tpu_custom_call.1} parent=1 // loop_body
      %s22 = ssub.s32 %s17, 1
      %s23 = ssub.s32 %s17, 2
      %s30 = sadd.s32 1, %s25
      %p31 = scmp.ge.s32.totalorder %s30, 1
      %s32 = scalar_select %p31, 0, %s30
      %s33 = sadd.s32 1, %s24
      %s34 = scalar_select %p31, %s33, %s24
      %p35 = scmp.ge.s32.totalorder %s34, 2
      %s36 = scalar_select %p35, 0, %s34
      %s37 = ssub.s32 %s24, %s36
      %s38 = ssub.s32 %s25, %s32
      %s39 = sor.u32 %s37, %s38
      %p40 = scmp.eq.s32.totalorder %s39, 0
      %s42 = sadd.s32 %s41, 1
      %s43 = scalar_select %p40, %s41, %s42
      %p46 = pneg %p40
      %p47 = scmp.eq.s32.totalorder %s17, 1
      %p48 = por %p46, %p47
      %p49 = scmp.ne.s32.totalorder %s41, %s44
      %p50 = scmp.eq.s32.totalorder %s17, 0
      %p51 = por %p49, %p50
      %p52 = scmp.ne.s32.totalorder %s41, %s44
      %p53 = scmp.eq.s32.totalorder %s22, 1
      %p54 = por %p52, %p53
      %p55 = scmp.ne.s32.totalorder %s44, %s45
      %p56 = scmp.eq.s32.totalorder %s22, 0
      %p57 = por %p55, %p56
      %p58 = scmp.ne.s32.totalorder %s44, %s45
      %p59 = scmp.eq.s32.totalorder %s23, 1
      %p60 = por %p58, %p59
      %p62 = scmp.ne.s32.totalorder %s45, %s61
      %p63 = scmp.eq.s32.totalorder %s23, 0
      %p64 = por %p62, %p63
      %s66 = sadd.s32 %s65, 1
      %p69 = scmp.eq.s32.totalorder %s17, 1
      %p70 = scmp.ne.s32.totalorder %s65, %s67
      %p71 = scmp.eq.s32.totalorder %s17, 0
      %p72 = por %p70, %p71
      %p73 = scmp.ne.s32.totalorder %s65, %s67
      %p74 = scmp.eq.s32.totalorder %s22, 1
      %p75 = por %p73, %p74
      %p76 = scmp.ne.s32.totalorder %s67, %s68
      %p77 = scmp.eq.s32.totalorder %s22, 0
      %p78 = por %p76, %p77
      %p79 = scmp.ne.s32.totalorder %s67, %s68
      %p80 = scmp.eq.s32.totalorder %s23, 1
      %p81 = por %p79, %p80
      %p83 = scmp.ne.s32.totalorder %s68, %s82
      %p84 = scmp.eq.s32.totalorder %s23, 0
      %p85 = por %p83, %p84
      %s87 = sadd.s32 %s86, 1
      %p90 = scmp.eq.s32.totalorder %s17, 1
      %p91 = scmp.ne.s32.totalorder %s86, %s88
      %p92 = scmp.eq.s32.totalorder %s17, 0
      %p93 = por %p91, %p92
      %p94 = scmp.ne.s32.totalorder %s86, %s88
      %p95 = scmp.eq.s32.totalorder %s22, 1
      %p96 = por %p94, %p95
      %p97 = scmp.ne.s32.totalorder %s88, %s89
      %p98 = scmp.eq.s32.totalorder %s22, 0
      %p99 = por %p97, %p98
      %p100 = scmp.ne.s32.totalorder %s88, %s89
      %p101 = scmp.eq.s32.totalorder %s23, 1
      %p102 = por %p100, %p101
      %p104 = scmp.ne.s32.totalorder %s89, %s103
      %p105 = scmp.eq.s32.totalorder %s23, 0
      %p106 = por %p104, %p105
      %s108 = sadd.s32 %s107, 1
      %p111 = scmp.eq.s32.totalorder %s17, 1
      %p112 = scmp.ne.s32.totalorder %s107, %s109
      %p113 = scmp.eq.s32.totalorder %s17, 0
      %p114 = por %p112, %p113
      %p115 = scmp.ne.s32.totalorder %s107, %s109
      %p116 = scmp.eq.s32.totalorder %s22, 1
      %p117 = por %p115, %p116
      %p118 = scmp.ne.s32.totalorder %s109, %s110
      %p119 = scmp.eq.s32.totalorder %s22, 0
      %p120 = por %p118, %p119
      %p121 = scmp.ne.s32.totalorder %s109, %s110
      %p122 = scmp.eq.s32.totalorder %s23, 1
      %p123 = por %p121, %p122
      %p125 = scmp.ne.s32.totalorder %s110, %s124
      %p126 = scmp.eq.s32.totalorder %s23, 0
      %p127 = por %p125, %p126
      %s129 = sadd.s32 %s128, 1
      %p132 = scmp.eq.s32.totalorder %s17, 1
      %p133 = scmp.ne.s32.totalorder %s128, %s130
      %p134 = scmp.eq.s32.totalorder %s17, 0
      %p135 = por %p133, %p134
      %p136 = scmp.ne.s32.totalorder %s128, %s130
      %p137 = scmp.eq.s32.totalorder %s22, 1
      %p138 = por %p136, %p137
      %p139 = scmp.ne.s32.totalorder %s130, %s131
      %p140 = scmp.eq.s32.totalorder %s22, 0
      %p141 = por %p139, %p140
      %p142 = scmp.ne.s32.totalorder %s130, %s131
      %p143 = scmp.eq.s32.totalorder %s23, 1
      %p144 = por %p142, %p143
      %p146 = scmp.ne.s32.totalorder %s131, %s145
      %p147 = scmp.eq.s32.totalorder %s23, 0
      %p148 = por %p146, %p147
      %s149 = ssub.s32 %s24, %s36
      %s150 = ssub.s32 %s25, %s32
      %s151 = sor.u32 %s149, %s150
      %p152 = scmp.eq.s32.totalorder %s151, 0
      %s154 = sadd.s32 %s153, 1
      %s155 = scalar_select %p152, %s153, %s154
      %p158 = pneg %p152
      %p159 = scmp.eq.s32.totalorder %s17, 1
      %p160 = por %p158, %p159
      %p161 = scmp.ne.s32.totalorder %s153, %s156
      %p162 = scmp.eq.s32.totalorder %s17, 0
      %p163 = por %p161, %p162
      %p164 = scmp.ne.s32.totalorder %s153, %s156
      %p165 = scmp.eq.s32.totalorder %s22, 1
      %p166 = por %p164, %p165
      %p167 = scmp.ne.s32.totalorder %s156, %s157
      %p168 = scmp.eq.s32.totalorder %s22, 0
      %p169 = por %p167, %p168
      %p170 = scmp.ne.s32.totalorder %s156, %s157
      %p171 = scmp.eq.s32.totalorder %s23, 1
      %p172 = por %p170, %p171
      %p174 = scmp.ne.s32.totalorder %s157, %s173
      %p175 = scmp.eq.s32.totalorder %s23, 0
      %p176 = por %p174, %p175
      %p177 = scmp.le.s32.totalorder 1, %s17
      %p178 = scmp.lt.s32.totalorder %s17, 3
      %p179 = pnand %p177, %p178
      %p180 = pneg %p179
      // Predicated region
      $region9: #{tpu_custom_call.1} parent=5 // pred_check
        _
      $region10: #{tpu_custom_call.1} parent=5 // pred_check_branch
        %182 = sbr.rel (%p179) target = $region12
      $region11: #{tpu_custom_call.1} parent=5 // pred_region
        %s183 = ssub.s32 %s17, 1
        // Predicated region
        $region13: #{tpu_custom_call.1} parent=11 // pred_check
          %p184 = pneg %p78
        $region14: #{tpu_custom_call.1} parent=11 // pred_check_branch
          %186 = sbr.rel (%p184) target = $region16
        $region15: #{tpu_custom_call.1} parent=11 // pred_region
          _
        $region16: #{tpu_custom_call.1} parent=11 // pred_fallthru
          _
        // Predicated region
        $region17: #{tpu_custom_call.1} parent=11 // pred_check
          %p187 = pneg %p99
        $region18: #{tpu_custom_call.1} parent=11 // pred_check_branch
          %189 = sbr.rel (%p187) target = $region20
        $region19: #{tpu_custom_call.1} parent=11 // pred_region
          _
        $region20: #{tpu_custom_call.1} parent=11 // pred_fallthru
          _
        // Predicated region
        $region21: #{tpu_custom_call.1} parent=11 // pred_check
          %p190 = pneg %p120
        $region22: #{tpu_custom_call.1} parent=11 // pred_check_branch
          %192 = sbr.rel (%p190) target = $region24
        $region23: #{tpu_custom_call.1} parent=11 // pred_region
          _
        $region24: #{tpu_custom_call.1} parent=11 // pred_fallthru
          _
        // Predicated region
        $region25: #{tpu_custom_call.1} parent=11 // pred_check
          %p193 = pneg %p141
        $region26: #{tpu_custom_call.1} parent=11 // pred_check_branch
          %195 = sbr.rel (%p193) target = $region28
        $region27: #{tpu_custom_call.1} parent=11 // pred_region
          _
        $region28: #{tpu_custom_call.1} parent=11 // pred_fallthru
          _
      $region12: #{tpu_custom_call.1} parent=5 // pred_fallthru
        _
      %p196 = scmp.lt.s32.totalorder %s17, 2
      // Predicated region
      $region29: #{tpu_custom_call.1} parent=5 // pred_check
        %p197 = pneg %p196
      $region30: #{tpu_custom_call.1} parent=5 // pred_check_branch
        %199 = sbr.rel (%p197) target = $region32
      $region31: #{tpu_custom_call.1} parent=5 // pred_region
        // Predicated region
        $region33: #{tpu_custom_call.1} parent=31 // pred_check
          %p200 = pneg %p51
        $region34: #{tpu_custom_call.1} parent=31 // pred_check_branch
          %202 = sbr.rel (%p200) target = $region36
        $region35: #{tpu_custom_call.1} parent=31 // pred_region
          %s203 = sand.u32 %s41, 1
          %s204 = scalar_lea.sflag [#allocation3], %s203
          %s205 = sand.u32 %s41, 1
          %s206 = smul.addr %s205, 8
          %s207 = scalar_lea.vmem [#allocation2], %s206
          %s208 = smul.u32 2, %s25
          %s210 = ssub.s32 128, 128
          %211 = vsyncadd %s204, %s210
          %s212 = smul.addr %s24, 2
          %s213 = sadd.s32 %s208, %s212
          %s214 = smul.addr %s213, 64
          %s215 = scalar_lea.hbm %s0, %s214
          %s217 = sshll.u32 %s207, 4
          %s218 = int_to_ptr.vmem [resolvable:$true] %s217
          %220 = dma.hbm_to_vmem [thread:$0]  %s215, 128, %s218, %s204
        $region36: #{tpu_custom_call.1} parent=31 // pred_fallthru
          _
      $region32: #{tpu_custom_call.1} parent=5 // pred_fallthru
        _
      %p221 = scmp.le.s32.totalorder 1, %s17
      %p222 = scmp.lt.s32.totalorder %s17, 3
      %p223 = pnand %p221, %p222
      %p224 = pneg %p223
      // Predicated region
      $region37: #{tpu_custom_call.1} parent=5 // pred_check
        _
      $region38: #{tpu_custom_call.1} parent=5 // pred_check_branch
        %226 = sbr.rel (%p223) target = $region40
      $region39: #{tpu_custom_call.1} parent=5 // pred_region
        %s227 = ssub.s32 %s17, 1
        %s228 = sand.u32 %s44, 1
        %s229 = scalar_lea.sflag [#allocation3], %s228
        %s230 = sand.u32 %s44, 1
        %s231 = smul.addr %s230, 8
        %s232 = scalar_lea.vmem [#allocation2], %s231
        // Predicated region
        $region41: #{tpu_custom_call.1} parent=39 // pred_check
          %p233 = pneg %p57
        $region42: #{tpu_custom_call.1} parent=39 // pred_check_branch
          %235 = sbr.rel (%p233) target = $region44
        $region43: #{tpu_custom_call.1} parent=39 // pred_region
          %236 = dma.done %s229, 128
        $region44: #{tpu_custom_call.1} parent=39 // pred_fallthru
          _
        %s237 = sand.u32 %s44, 1
        %s238 = scalar_lea.sflag [#allocation3], %s237
        %s239 = sand.u32 %s44, 1
        %s240 = smul.addr %s239, 8
        %s241 = scalar_lea.vmem [#allocation2], %s240
        %p242 = pneg %p57
        %p243 = pneg %p54
        %p244 = pneg %p78
        %p245 = pneg %p75
        %p246 = pneg %p99
        %p247 = pneg %p96
        %p248 = pneg %p120
        %p249 = pneg %p117
        %p250 = pneg %p141
        %p251 = pneg %p138
        %p252 = pneg %p169
        %p253 = pneg %p166
        %s254 = sand.u32 %s156, 1
        %s255 = scalar_lea.sflag [#allocation4], %s254
        %s256 = sand.u32 %s156, 1
        %s257 = smul.addr %s256, 8
        %s258 = scalar_lea.vmem [#allocation5], %s257
        %s259 = smul.u32 2, %s27
        %s260 = smul.u32 2, %s27
        %v261 = vld [vmem:[%s232] sm:$0xff]
        %v262 = vld [vmem:[%s1] sm:$0xf]
        %v263 = vld [vmem:[%s2] sm:$0xf]
        %265 = vset.pattern.permute.xlu0 0
        %266 = vperm.xlu0 %265, %v263
        %v267 = vpop.permute.xlu0 %266
        %v270 = vcombine.high %v261, %v261
        %vm271 = vcmask 31744
        %v273 = vsel %vm271, %v262, 0
        %vm275 = vcmask 1043456
        %v276 = vsel %vm275, %v261, 0
        %v278 = vsel %vm275, %v270, 0
        %280 = vmatprep.subr.mxu0 0.0
        %281 = vmatpush1.msra.mxu0 0.0
        %282 = vmatprep.subr.mxu0 0.0
        %283 = vmatpush1.msra.mxu0 0.0
        %284 = vmatprep.subr.mxu0 0.0
        %285 = vmatpush1.msra.mxu0 0.0
        %286 = vmatprep.subr.mxu0 0.0
        %287 = vmatpush1.msra.mxu0 0.0
        %288 = vmatprep.subr.mxu0 0.0
        %289 = vmatpush1.msra.mxu0 0.0
        %290 = vmatprep.subr.mxu0 0.0
        %291 = vmatpush1.msra.mxu0 0.0
        %292 = vmatprep.subr.mxu0 0.0
        %293 = vmatpush1.msra.mxu0 0.0
        %294 = vmatprep.subr.mxu0 0.0
        %295 = vmatpush1.msra.mxu0 0.0
        %296 = vmatprep.subr.mxu0 0.0
        %297 = vmatpush1.msra.mxu0 0.0
        %298 = vmatprep.subr.mxu0 0.0
        %299 = vmatpush1.msra.mxu0 0.0
        %300 = vmatprep.subr.mxu0 0.0
        %301 = vmatpush1.msra.mxu0 0.0
        %302 = vmatprep.subr.mxu0 0.0
        %303 = vmatpush1.msra.mxu0 0.0
        %304 = vmatprep.subr.mxu0 0.0
        %305 = vmatpush1.msra.mxu0 0.0
        %306 = vmatprep.subr.mxu0 0.0
        %307 = vmatpush1.msra.mxu0 0.0
        %308 = vmatprep.subr.mxu0 0.0
        %309 = vmatpush1.msra.mxu0 0.0
        %310 = vmatprep.subr.mxu0 %v278
        %311 = vmatpush1.msra.mxu0 %v276
        %312 = vmatprep.subr.mxu0 0.0
        %313 = vmatpush2.msra.mxu0 0.0
        %314 = vmatprep.subr.mxu0 0.0
        %315 = vmatpush2.msra.mxu0 0.0
        %316 = vmatprep.subr.mxu0 0.0
        %317 = vmatpush2.msra.mxu0 0.0
        %318 = vmatprep.subr.mxu0 0.0
        %319 = vmatpush2.msra.mxu0 0.0
        %320 = vmatprep.subr.mxu0 0.0
        %321 = vmatpush2.msra.mxu0 0.0
        %322 = vmatprep.subr.mxu0 0.0
        %323 = vmatpush2.msra.mxu0 0.0
        %324 = vmatprep.subr.mxu0 0.0
        %325 = vmatpush2.msra.mxu0 0.0
        %326 = vmatprep.subr.mxu0 0.0
        %327 = vmatpush2.msra.mxu0 0.0
        %328 = vmatprep.subr.mxu0 0.0
        %329 = vmatpush2.msra.mxu0 0.0
        %330 = vmatprep.subr.mxu0 0.0
        %331 = vmatpush2.msra.mxu0 0.0
        %332 = vmatprep.subr.mxu0 0.0
        %333 = vmatpush2.msra.mxu0 0.0
        %334 = vmatprep.subr.mxu0 0.0
        %335 = vmatpush2.msra.mxu0 0.0
        %336 = vmatprep.subr.mxu0 0.0
        %337 = vmatpush2.msra.mxu0 0.0
        %338 = vmatprep.subr.mxu0 0.0
        %339 = vmatpush2.msra.mxu0 0.0
        %340 = vmatprep.subr.mxu0 0.0
        %341 = vmatpush2.msra.mxu0 0.0
        %342 = vmatprep.subr.mxu0 0.0
        %343 = vmatpush2.msra.mxu0 0.0
        %344 = vmatprep.mubr.f32.mxu0 0.0
        %345 = vmatmul.mubr.f32.gmra.mxu0 %v273
        %v346 = vpop.f32.mrf.mxu0
        %v347 = vadd.f32 %v267, %v346
        %v348 = vpop.f32.mrf.mxu0
        %v349 = vadd.f32 %v267, %v348
        %350 = vdwg.mxu0
        %v351 = vld [vmem:[%s3] sm:$0xf]
        %v352 = vld [vmem:[%s4] sm:$0xf]
        %354 = vset.pattern.permute.xlu0 0
        %355 = vperm.xlu0 %354, %v352
        %v356 = vpop.permute.xlu0 %355
        %v359 = vsel %vm271, %v351, 0
        %v362 = vsel %vm275, %v347, 0
        %v365 = vsel %vm275, %v349, 0
        %367 = vmatprep.subr.mxu0 0.0
        %368 = vmatpush1.msra.mxu0 0.0
        %369 = vmatprep.subr.mxu0 0.0
        %370 = vmatpush1.msra.mxu0 0.0
        %371 = vmatprep.subr.mxu0 0.0
        %372 = vmatpush1.msra.mxu0 0.0
        %373 = vmatprep.subr.mxu0 0.0
        %374 = vmatpush1.msra.mxu0 0.0
        %375 = vmatprep.subr.mxu0 0.0
        %376 = vmatpush1.msra.mxu0 0.0
        %377 = vmatprep.subr.mxu0 0.0
        %378 = vmatpush1.msra.mxu0 0.0
        %379 = vmatprep.subr.mxu0 0.0
        %380 = vmatpush1.msra.mxu0 0.0
        %381 = vmatprep.subr.mxu0 0.0
        %382 = vmatpush1.msra.mxu0 0.0
        %383 = vmatprep.subr.mxu0 0.0
        %384 = vmatpush1.msra.mxu0 0.0
        %385 = vmatprep.subr.mxu0 0.0
        %386 = vmatpush1.msra.mxu0 0.0
        %387 = vmatprep.subr.mxu0 0.0
        %388 = vmatpush1.msra.mxu0 0.0
        %389 = vmatprep.subr.mxu0 0.0
        %390 = vmatpush1.msra.mxu0 0.0
        %391 = vmatprep.subr.mxu0 0.0
        %392 = vmatpush1.msra.mxu0 0.0
        %393 = vmatprep.subr.mxu0 0.0
        %394 = vmatpush1.msra.mxu0 0.0
        %395 = vmatprep.subr.mxu0 0.0
        %396 = vmatpush1.msra.mxu0 0.0
        %397 = vmatprep.subr.mxu0 %v365
        %398 = vmatpush1.msra.mxu0 %v362
        %399 = vmatprep.subr.mxu0 0.0
        %400 = vmatpush2.msra.mxu0 0.0
        %401 = vmatprep.subr.mxu0 0.0
        %402 = vmatpush2.msra.mxu0 0.0
        %403 = vmatprep.subr.mxu0 0.0
        %404 = vmatpush2.msra.mxu0 0.0
        %405 = vmatprep.subr.mxu0 0.0
        %406 = vmatpush2.msra.mxu0 0.0
        %407 = vmatprep.subr.mxu0 0.0
        %408 = vmatpush2.msra.mxu0 0.0
        %409 = vmatprep.subr.mxu0 0.0
        %410 = vmatpush2.msra.mxu0 0.0
        %411 = vmatprep.subr.mxu0 0.0
        %412 = vmatpush2.msra.mxu0 0.0
        %413 = vmatprep.subr.mxu0 0.0
        %414 = vmatpush2.msra.mxu0 0.0
        %415 = vmatprep.subr.mxu0 0.0
        %416 = vmatpush2.msra.mxu0 0.0
        %417 = vmatprep.subr.mxu0 0.0
        %418 = vmatpush2.msra.mxu0 0.0
        %419 = vmatprep.subr.mxu0 0.0
        %420 = vmatpush2.msra.mxu0 0.0
        %421 = vmatprep.subr.mxu0 0.0
        %422 = vmatpush2.msra.mxu0 0.0
        %423 = vmatprep.subr.mxu0 0.0
        %424 = vmatpush2.msra.mxu0 0.0
        %425 = vmatprep.subr.mxu0 0.0
        %426 = vmatpush2.msra.mxu0 0.0
        %427 = vmatprep.subr.mxu0 0.0
        %428 = vmatpush2.msra.mxu0 0.0
        %429 = vmatprep.subr.mxu0 0.0
        %430 = vmatpush2.msra.mxu0 0.0
        %431 = vmatprep.mubr.f32.mxu0 0.0
        %432 = vmatmul.mubr.f32.gmra.mxu0 %v359
        %v433 = vpop.f32.mrf.mxu0
        %v434 = vadd.f32 %v356, %v433
        %v435 = vpop.f32.mrf.mxu0
        %v436 = vadd.f32 %v356, %v435
        %437 = vdwg.mxu0
        %v439 = vadd.f32 %v434, %v261
        %v440 = vadd.f32 %v436, %v270
        %v443 = vcombine.low %v439, %v440
        %445 = vst [vmem:[%s258] sm:$0xff] %v443
        %s446 = sand.u32 %s156, 1
        %s447 = scalar_lea.sflag [#allocation4], %s446
        %s448 = sand.u32 %s156, 1
        %s449 = smul.addr %s448, 8
        %s450 = scalar_lea.vmem [#allocation5], %s449
        // Predicated region
        $region45: #{tpu_custom_call.1} parent=39 // pred_check
          %p451 = pneg %p166
        $region46: #{tpu_custom_call.1} parent=39 // pred_check_branch
          %453 = sbr.rel (%p451) target = $region48
        $region47: #{tpu_custom_call.1} parent=39 // pred_region
          %s454 = smul.u32 2, %s27
          %s456 = ssub.s32 128, 128
          %457 = vsyncadd %s447, %s456
          %s458 = smul.addr %s26, 2
          %s459 = sadd.s32 %s454, %s458
          %s460 = smul.addr %s459, 64
          %s461 = scalar_lea.hbm %s5, %s460
          %s463 = sshll.u32 %s450, 4
          %s464 = int_to_ptr.vmem [resolvable:$true] %s463
          %466 = dma.vmem_to_hbm [thread:$0]  %s464, 128, %s461, %s447
        $region48: #{tpu_custom_call.1} parent=39 // pred_fallthru
          _
      $region40: #{tpu_custom_call.1} parent=5 // pred_fallthru
        _
      %p467 = scmp.le.s32.totalorder 2, %s17
      // Predicated region
      $region49: #{tpu_custom_call.1} parent=5 // pred_check
        %p468 = pneg %p467
      $region50: #{tpu_custom_call.1} parent=5 // pred_check_branch
        %470 = sbr.rel (%p468) target = $region52
      $region51: #{tpu_custom_call.1} parent=5 // pred_region
        %s471 = ssub.s32 %s17, 2
        // Predicated region
        $region53: #{tpu_custom_call.1} parent=51 // pred_check
          %p472 = pneg %p172
        $region54: #{tpu_custom_call.1} parent=51 // pred_check_branch
          %474 = sbr.rel (%p472) target = $region56
        $region55: #{tpu_custom_call.1} parent=51 // pred_region
          %s475 = sand.u32 %s157, 1
          %s476 = scalar_lea.sflag [#allocation4], %s475
          %s477 = sand.u32 %s157, 1
          %s478 = smul.addr %s477, 8
          %s479 = scalar_lea.vmem [#allocation5], %s478
          %480 = dma.done %s476, 128
        $region56: #{tpu_custom_call.1} parent=51 // pred_fallthru
          _
      $region52: #{tpu_custom_call.1} parent=5 // pred_fallthru
        _
    $region6: #{tpu_custom_call.1} parent=1 // loop_footer
      %s21 = sadd.s32 1, %s17
    $region7: #{tpu_custom_call.1} parent=1 // loop_footer_branch
      %16 = sbr.rel target = $region3
    $region8: #{tpu_custom_call.1} parent=1 // loop_exit
      _
    %481 = vsyncpa [#allocation3], 1
    %s482 = scalar_lea.sflag [#allocation3], 1
    %483 = vsyncpa %s482, 1
    %484 = vsyncpa [#allocation4], 1
    %s485 = scalar_lea.sflag [#allocation4], 1
    %486 = vsyncpa %s485, 1

</llo_original>
